<compile_context>
chip_gen: v7x
topology: tpu7x:2x2x1
jax: 0.10.0
libtpu: 0.0.40
codegen_flags: <defaults>
</compile_context>

<pallas_src>
import numpy as np
import jax
import jax.numpy as jnp
from jax.experimental import pallas as pl
from jax.experimental.pallas import tpu as pltpu

HIDDEN_SIZE = 96
INPUT_SIZE = 192
NUM_EMBEDDINGS = 38


# ----------------------------------------------------------------------------
# Kernel (single cell step; everything resident in VMEM, no grid)
# ----------------------------------------------------------------------------
def attn_gru_kernel(
    prev_h_ref,                         # (B, Hp)  f32, zero in padded lanes
    bh_flat_ref,                        # (B*T, D) f32  (batch_H flattened)
    onehot_ref,                         # (B, E)   f32
    w_bh_all_ref,                       # (D, 4*Hp)  [i2h | W_ir_ctx | W_iz_ctx | W_in_ctx]
    w_h_all_ref,                        # (Hp, 4*Hp) [h2h | W_hr | W_hz | W_hn]
    w_emb_all_ref,                      # (E, 3*Hp)  [W_ir_emb | W_iz_emb | W_in_emb]
    w_score_ref,                        # (1, Hp)
    b_h_all_ref,                        # (1, 4*Hp)  [b_h2h | 0 | 0 | b_hn]
    b_x_all_ref,                        # (1, 3*Hp)  [b_ir+b_hr | b_iz+b_hz | b_in]
    cur_h_ref, alpha_ref,               # outputs: (B, Hp), (B, T)
):
    B, Hp = prev_h_ref.shape
    T = alpha_ref.shape[1]

    prev_h = prev_h_ref[...]                                   # (B, Hp)

    # ---- fused hidden-path matmul: [h2h | gh_r | gh_z | gh_n] --------------
    gh_all = (jnp.dot(prev_h, w_h_all_ref[...],
                      preferred_element_type=jnp.float32)
              + b_h_all_ref[...])                              # (B, 4*Hp)
    ph_proj = gh_all[:, 0 * Hp:1 * Hp]                         # h2h(prev_h) + b_h2h
    gh_r    = gh_all[:, 1 * Hp:2 * Hp]
    gh_z    = gh_all[:, 2 * Hp:3 * Hp]
    gh_n    = gh_all[:, 3 * Hp:4 * Hp]                         # includes b_hn

    # ---- fused batch_H matmul: bh_proj + per-(b,t) context-gate preacts ----
    big = jnp.dot(bh_flat_ref[...], w_bh_all_ref[...],
                  preferred_element_type=jnp.float32)          # (B*T, 4*Hp)
    big = big.reshape(B, T, 4 * Hp)                            # leading-dim split only
    bh_proj   = big[:, :, 0 * Hp:1 * Hp]                       # (B, T, Hp)
    ctx_gates = big[:, :, 1 * Hp:4 * Hp]                       # (B, T, 3*Hp)

    # one-hot embedding contribution; independent of the attention path, so it
    # hides under the big matmul above.
    gx_emb = jnp.dot(onehot_ref[...], w_emb_all_ref[...],
                     preferred_element_type=jnp.float32)       # (B, 3*Hp)

    # ---- attention scores + softmax over T ----------------------------------
    res = jnp.tanh(bh_proj + ph_proj[:, None, :])              # (B, T, Hp)
    w_s = w_score_ref[...]                                     # (1, Hp), padded lanes zero
    e = jnp.sum(res * w_s[None, :, :], axis=-1)                # (B, T)  (XLU reduce)

    e_max = jnp.max(e, axis=1, keepdims=True)
    p = jnp.exp(e - e_max)
    alpha = p / jnp.sum(p, axis=1, keepdims=True)              # (B, T)
    alpha_ref[...] = alpha.astype(alpha_ref.dtype)

    # ---- context gates: alpha-weighted reduce over T (VPU mul + XLU sum) ----
    # replaces (alpha @ batch_H) @ W_ctx — matmul associativity, no MXU pass.
    gx = jnp.sum(alpha[:, :, None] * ctx_gates, axis=1)        # (B, 3*Hp)
    gx = gx + gx_emb + b_x_all_ref[...]

    gx_r = gx[:, 0 * Hp:1 * Hp]
    gx_z = gx[:, 1 * Hp:2 * Hp]
    gx_n = gx[:, 2 * Hp:3 * Hp]

    # ---- GRU cell ------------------------------------------------------------
    r = jax.nn.sigmoid(gx_r + gh_r)
    z = jax.nn.sigmoid(gx_z + gh_z)
    n = jnp.tanh(gx_n + r * gh_n)
    cur_h = (1.0 - z) * n + z * prev_h
    cur_h_ref[...] = cur_h.astype(cur_h_ref.dtype)             # lane-dense (B, Hp) store


# ----------------------------------------------------------------------------
# One-time parameter packing (do NOT call per decode step)
# ----------------------------------------------------------------------------
def pack_params(params):
    """Fuse / transpose / pad the torch-layout weights once, at load time."""
    H = params['h2h_w'].shape[0]
    D = params['i2h_w'].shape[1]
    Hp = ((H + 127) // 128) * 128                              # 96 -> 128 (lane dense)

    w_ih = params['rnn_w_ih']                                  # (3H, D+E), gates r,z,n
    w_hh = params['rnn_w_hh']                                  # (3H, H)
    b_ih = params['rnn_b_ih']                                  # (3H,)
    b_hh = params['rnn_b_hh']                                  # (3H,)

    def g(mat, i):
        return mat[i * H:(i + 1) * H]

    def pad_last(x, n):                                        # zero-pad last dim to n
        return jnp.pad(x, [(0, 0)] * (x.ndim - 1) + [(0, n - x.shape[-1])])

    def to_in_out(w):                                          # torch (out,in) -> (in, Hp)
        return pad_last(w.T.astype(jnp.float32), Hp)

    def pad_rows(w, n):                                        # zero-pad contraction rows
        return jnp.pad(w, [(0, n - w.shape[0]), (0, 0)])

    # fused batch_H-path weight: [i2h | W_ir_ctx | W_iz_ctx | W_in_ctx] -> (D, 4*Hp)
    w_bh_all = jnp.concatenate(
        [to_in_out(params['i2h_w']),
         to_in_out(g(w_ih, 0)[:, :D]),
         to_in_out(g(w_ih, 1)[:, :D]),
         to_in_out(g(w_ih, 2)[:, :D])], axis=1)

    # fused hidden-path weight: [h2h | W_hr | W_hz | W_hn] -> (Hp, 4*Hp)
    w_h_all = jnp.concatenate(
        [pad_rows(to_in_out(params['h2h_w']), Hp),
         pad_rows(to_in_out(g(w_hh, 0)), Hp),
         pad_rows(to_in_out(g(w_hh, 1)), Hp),
         pad_rows(to_in_out(g(w_hh, 2)), Hp)], axis=1)

    # one-hot (embedding) part of the input-gate weights -> (E, 3*Hp)
    w_emb_all = jnp.concatenate(
        [to_in_out(g(w_ih, 0)[:, D:]),
         to_in_out(g(w_ih, 1)[:, D:]),
         to_in_out(g(w_ih, 2)[:, D:])], axis=1)

    w_score = pad_last(params['score_w'].astype(jnp.float32), Hp)   # (1, Hp)

    def pad_bias(b):
        return pad_last(b.reshape(1, H).astype(jnp.float32), Hp)

    zeros_b = jnp.zeros((1, Hp), jnp.float32)
    b_h_all = jnp.concatenate(                                 # [b_h2h | 0 | 0 | b_hn]
        [pad_bias(params['h2h_b']), zeros_b, zeros_b, pad_bias(g(b_hh, 2))],
        axis=1)
    b_x_all = jnp.concatenate(                                 # [b_ir+b_hr | b_iz+b_hz | b_in]
        [pad_bias(g(b_ih, 0) + g(b_hh, 0)),
         pad_bias(g(b_ih, 1) + g(b_hh, 1)),
         pad_bias(g(b_ih, 2))], axis=1)

    # TODO(synk): optionally cast the packed weights to bfloat16 (halves the
    # HBM bytes streamed per call); kept f32 here to preserve the 1e-5 match
    # against the float32 reference.
    return dict(H=H, Hp=Hp, w_bh_all=w_bh_all, w_h_all=w_h_all,
                w_emb_all=w_emb_all, w_score=w_score,
                b_h_all=b_h_all, b_x_all=b_x_all)


# ----------------------------------------------------------------------------
# Per-call wrapper (cheap: pad hidden, flatten batch_H, launch kernel)
# ----------------------------------------------------------------------------
def attention_gru_cell(prev_hidden, batch_H, char_onehots, packed):
    B, T, D = batch_H.shape
    H, Hp = packed['H'], packed['Hp']
    E = char_onehots.shape[1]

    prev_h_pad = jnp.pad(prev_hidden, ((0, 0), (0, Hp - H)))   # (B, Hp)
    bh_flat = batch_H.reshape(B * T, D)                        # layout no-op
    onehot_f32 = char_onehots.astype(jnp.float32)              # (B, E)

    # advisory cost estimate so XLA schedules neighbours around the tiny call
    flops = 2 * (B * T * D * 4 * Hp + B * Hp * 4 * Hp + B * E * 3 * Hp)
    transcendentals = B * T * Hp + B * T + 4 * B * Hp
    bytes_accessed = 4 * (D * 4 * Hp + Hp * 4 * Hp + E * 3 * Hp + 7 * Hp
                          + B * T * D + B * E + B * Hp + B * Hp + B * T)

    vmem = pl.BlockSpec(memory_space=pltpu.MemorySpace.VMEM)

    cur_h_pad, alpha = pl.pallas_call(
        attn_gru_kernel,
        out_shape=(jax.ShapeDtypeStruct((B, Hp), jnp.float32),
                   jax.ShapeDtypeStruct((B, T), jnp.float32)),
        in_specs=[vmem] * 9,
        out_specs=(vmem, vmem),
        cost_estimate=pl.CostEstimate(flops=flops,
                                      transcendentals=transcendentals,
                                      bytes_accessed=bytes_accessed),
    )(prev_h_pad, bh_flat, onehot_f32,
      packed['w_bh_all'], packed['w_h_all'], packed['w_emb_all'],
      packed['w_score'], packed['b_h_all'], packed['b_x_all'])

    cur_hidden = cur_h_pad[:, :H]                              # drop padded lanes
    alpha = alpha.reshape(B, 1, T)                             # matches torch permute(0,2,1)
    return (cur_hidden, cur_hidden), alpha


# ----------------------------------------------------------------------------
# Deterministic parameter init (shapes follow the torch module __init__)
# ----------------------------------------------------------------------------
def init_params(key, input_size, hidden_size, num_embeddings):
    H, D, E = hidden_size, input_size, num_embeddings
    ks = jax.random.split(key, 8)

    def uni(k, shape, fan_in):
        bound = 1.0 / np.sqrt(fan_in)
        return jax.random.uniform(k, shape, jnp.float32, -bound, bound)

    return dict(
        i2h_w=uni(ks[0], (H, D), D),                # Linear(D, H, bias=False)
        h2h_w=uni(ks[1], (H, H), H),                # Linear(H, H)
        h2h_b=uni(ks[2], (H,), H),
        score_w=uni(ks[3], (1, H), H),              # Linear(H, 1, bias=False)
        rnn_w_ih=uni(ks[4], (3 * H, D + E), H),     # GRUCell weights (r,z,n)
        rnn_w_hh=uni(ks[5], (3 * H, H), H),
        rnn_b_ih=uni(ks[6], (3 * H,), H),
        rnn_b_hh=uni(ks[7], (3 * H,), H),
    )


# ----------------------------------------------------------------------------
# Pure-JAX reference (mirrors the torch forward exactly)
# ----------------------------------------------------------------------------
def reference(prev_hidden, batch_H, char_onehots, p):
    bh_proj = batch_H @ p['i2h_w'].T
    ph_proj = (prev_hidden @ p['h2h_w'].T + p['h2h_b'])[:, None, :]
    res = jnp.tanh(bh_proj + ph_proj)
    e = res @ p['score_w'].T                               # (B, T, 1)
    alpha = jax.nn.softmax(e, axis=1)
    alpha_p = jnp.transpose(alpha, (0, 2, 1))              # (B, 1, T)
    context = jnp.squeeze(jnp.matmul(alpha_p, batch_H), axis=1)
    x = jnp.concatenate([context, char_onehots.astype(jnp.float32)], axis=1)
    gi = x @ p['rnn_w_ih'].T + p['rnn_b_ih']
    gh = prev_hidden @ p['rnn_w_hh'].T + p['rnn_b_hh']
    i_r, i_z, i_n = jnp.split(gi, 3, axis=1)
    h_r, h_z, h_n = jnp.split(gh, 3, axis=1)
    r = jax.nn.sigmoid(i_r + h_r)
    z = jax.nn.sigmoid(i_z + h_z)
    n = jnp.tanh(i_n + r * h_n)
    h = (1.0 - z) * n + z * prev_hidden
    return (h, h), alpha_p


if __name__ == "__main__":
    B, T = 2, 8
    H, D, E = HIDDEN_SIZE, INPUT_SIZE, NUM_EMBEDDINGS

    root = jax.random.PRNGKey(0)
    k_param, k_h, k_bh, k_idx = jax.random.split(root, 4)

    params = init_params(k_param, D, H, E)
    packed = jax.tree_util.tree_map(
        lambda x: x, pack_params(params))                  # packed once, reused per call
    prev_hidden = jax.random.normal(k_h, (B, H), jnp.float32)
    batch_H = jax.random.normal(k_bh, (B, T, D), jnp.float32)
    char_idx = jax.random.randint(k_idx, (B,), 0, E)
    char_onehots = jax.nn.one_hot(char_idx, E, dtype=jnp.int32)

    (cur_h, cur_h2), alpha = attention_gru_cell(prev_hidden, batch_H,
                                                char_onehots, packed)
    jax.block_until_ready(cur_h)
    jax.block_until_ready(alpha)

    (ref_h, _), ref_alpha = reference(prev_hidden, batch_H, char_onehots, params)
    np.testing.assert_allclose(np.asarray(alpha), np.asarray(ref_alpha),
                               rtol=1e-5, atol=1e-5)
    np.testing.assert_allclose(np.asarray(cur_h), np.asarray(ref_h),
                               rtol=1e-5, atol=2e-5)

    print("KERNEL_OK")
</pallas_src>

<mosaic_0001>
module attributes {stable_mosaic.version = 11 : i64} {
  func.func @attn_gru_kernel(%arg0: memref<2x128xf32, #tpu.memory_space<vmem>>, %arg1: memref<16x192xf32, #tpu.memory_space<vmem>>, %arg2: memref<2x38xf32, #tpu.memory_space<vmem>>, %arg3: memref<192x512xf32, #tpu.memory_space<vmem>>, %arg4: memref<128x512xf32, #tpu.memory_space<vmem>>, %arg5: memref<38x384xf32, #tpu.memory_space<vmem>>, %arg6: memref<1x128xf32, #tpu.memory_space<vmem>>, %arg7: memref<1x512xf32, #tpu.memory_space<vmem>>, %arg8: memref<1x384xf32, #tpu.memory_space<vmem>>, %arg9: memref<2x128xf32, #tpu.memory_space<vmem>>, %arg10: memref<2x8xf32, #tpu.memory_space<vmem>>) attributes {dimension_semantics = [], scalar_prefetch = 0 : i64, scratch_operands = 0 : i64, tpu.core_type = #tpu.core_type<tc>} {
    %c0 = arith.constant 0 : index
    %c0_0 = arith.constant 0 : index
    %0 = vector.load %arg0[%c0, %c0_0] : memref<2x128xf32, #tpu.memory_space<vmem>>, vector<2x128xf32>
    %c0_1 = arith.constant 0 : index
    %c0_2 = arith.constant 0 : index
    %1 = vector.load %arg4[%c0_1, %c0_2] : memref<128x512xf32, #tpu.memory_space<vmem>>, vector<128x512xf32>
    %cst = arith.constant dense<0.000000e+00> : vector<2x512xf32>
    %2 = tpu.matmul %0, %1, %cst {dimension_numbers = #tpu.dot_dimension_numbers<[1], [0], [0], [1], [0, 0, 1, 1], [], []>} : vector<2x128xf32>, vector<128x512xf32>, vector<2x512xf32> -> vector<2x512xf32>
    %c0_3 = arith.constant 0 : index
    %c0_4 = arith.constant 0 : index
    %3 = vector.load %arg7[%c0_3, %c0_4] : memref<1x512xf32, #tpu.memory_space<vmem>>, vector<1x512xf32>
    %4 = vector.broadcast %3 : vector<1x512xf32> to vector<2x512xf32>
    %5 = arith.addf %2, %4 : vector<2x512xf32>
    %6 = vector.extract_strided_slice %5 {offsets = [0, 0], sizes = [2, 128], strides = [1, 1]} : vector<2x512xf32> to vector<2x128xf32>
    %7 = vector.extract_strided_slice %5 {offsets = [0, 128], sizes = [2, 128], strides = [1, 1]} : vector<2x512xf32> to vector<2x128xf32>
    %8 = vector.extract_strided_slice %5 {offsets = [0, 256], sizes = [2, 128], strides = [1, 1]} : vector<2x512xf32> to vector<2x128xf32>
    %9 = vector.extract_strided_slice %5 {offsets = [0, 384], sizes = [2, 128], strides = [1, 1]} : vector<2x512xf32> to vector<2x128xf32>
    %c0_5 = arith.constant 0 : index
    %c0_6 = arith.constant 0 : index
    %10 = vector.load %arg1[%c0_5, %c0_6] : memref<16x192xf32, #tpu.memory_space<vmem>>, vector<16x192xf32>
    %c0_7 = arith.constant 0 : index
    %c0_8 = arith.constant 0 : index
    %11 = vector.load %arg3[%c0_7, %c0_8] : memref<192x512xf32, #tpu.memory_space<vmem>>, vector<192x512xf32>
    %cst_9 = arith.constant dense<0.000000e+00> : vector<16x512xf32>
    %12 = tpu.matmul %10, %11, %cst_9 {dimension_numbers = #tpu.dot_dimension_numbers<[1], [0], [0], [1], [0, 0, 1, 1], [], []>} : vector<16x192xf32>, vector<192x512xf32>, vector<16x512xf32> -> vector<16x512xf32>
    %13 = vector.shape_cast %12 : vector<16x512xf32> to vector<2x8x512xf32>
    %14 = vector.extract_strided_slice %13 {offsets = [0, 0, 0], sizes = [2, 8, 128], strides = [1, 1, 1]} : vector<2x8x512xf32> to vector<2x8x128xf32>
    %15 = vector.extract_strided_slice %13 {offsets = [0, 0, 128], sizes = [2, 8, 384], strides = [1, 1, 1]} : vector<2x8x512xf32> to vector<2x8x384xf32>
    %c0_10 = arith.constant 0 : index
    %c0_11 = arith.constant 0 : index
    %16 = vector.load %arg2[%c0_10, %c0_11] : memref<2x38xf32, #tpu.memory_space<vmem>>, vector<2x38xf32>
    %c0_12 = arith.constant 0 : index
    %c0_13 = arith.constant 0 : index
    %17 = vector.load %arg5[%c0_12, %c0_13] : memref<38x384xf32, #tpu.memory_space<vmem>>, vector<38x384xf32>
    %cst_14 = arith.constant dense<0.000000e+00> : vector<2x384xf32>
    %18 = tpu.matmul %16, %17, %cst_14 {dimension_numbers = #tpu.dot_dimension_numbers<[1], [0], [0], [1], [0, 0, 1, 1], [], []>} : vector<2x38xf32>, vector<38x384xf32>, vector<2x384xf32> -> vector<2x384xf32>
    %19 = vector.shape_cast %6 : vector<2x128xf32> to vector<2x1x128xf32>
    %20 = vector.broadcast %19 : vector<2x1x128xf32> to vector<2x8x128xf32>
    %21 = arith.addf %14, %20 : vector<2x8x128xf32>
    %22 = math.tanh %21 : vector<2x8x128xf32>
    %c0_15 = arith.constant 0 : index
    %c0_16 = arith.constant 0 : index
    %23 = vector.load %arg6[%c0_15, %c0_16] : memref<1x128xf32, #tpu.memory_space<vmem>>, vector<1x128xf32>
    %24 = vector.shape_cast %23 : vector<1x128xf32> to vector<1x1x128xf32>
    %25 = vector.broadcast %24 : vector<1x1x128xf32> to vector<2x8x128xf32>
    %26 = arith.mulf %22, %25 : vector<2x8x128xf32>
    %cst_17 = arith.constant dense<0.000000e+00> : vector<2x8xf32>
    %27 = vector.multi_reduction <add>, %26, %cst_17 [2] : vector<2x8x128xf32> to vector<2x8xf32>
    %cst_18 = arith.constant dense<0xFF800000> : vector<2xf32>
    %28 = vector.multi_reduction <maximumf>, %27, %cst_18 [1] : vector<2x8xf32> to vector<2xf32>
    %29 = vector.shape_cast %28 : vector<2xf32> to vector<2x1xf32>
    %30 = vector.broadcast %29 : vector<2x1xf32> to vector<2x8xf32>
    %31 = arith.subf %27, %30 : vector<2x8xf32>
    %32 = math.exp %31 : vector<2x8xf32>
    %cst_19 = arith.constant dense<0.000000e+00> : vector<2xf32>
    %33 = vector.multi_reduction <add>, %32, %cst_19 [1] : vector<2x8xf32> to vector<2xf32>
    %34 = vector.shape_cast %33 : vector<2xf32> to vector<2x1xf32>
    %35 = vector.broadcast %34 : vector<2x1xf32> to vector<2x8xf32>
    %36 = arith.divf %32, %35 : vector<2x8xf32>
    %c0_20 = arith.constant 0 : index
    %c0_21 = arith.constant 0 : index
    %37 = vector.load %arg10[%c0_20, %c0_21] : memref<2x8xf32, #tpu.memory_space<vmem>>, vector<2x8xf32>
    tpu.vector_store %arg10[%c0_20, %c0_21], %36 {strides = array<i32>} : memref<2x8xf32, #tpu.memory_space<vmem>>, vector<2x8xf32>,
    %38 = vector.shape_cast %36 : vector<2x8xf32> to vector<2x8x1xf32>
    %39 = vector.broadcast %38 : vector<2x8x1xf32> to vector<2x8x384xf32>
    %40 = arith.mulf %39, %15 : vector<2x8x384xf32>
    %cst_22 = arith.constant dense<0.000000e+00> : vector<2x384xf32>
    %41 = vector.multi_reduction <add>, %40, %cst_22 [1] : vector<2x8x384xf32> to vector<2x384xf32>
    %42 = arith.addf %41, %18 : vector<2x384xf32>
    %c0_23 = arith.constant 0 : index
    %c0_24 = arith.constant 0 : index
    %43 = vector.load %arg8[%c0_23, %c0_24] : memref<1x384xf32, #tpu.memory_space<vmem>>, vector<1x384xf32>
    %44 = vector.broadcast %43 : vector<1x384xf32> to vector<2x384xf32>
    %45 = arith.addf %42, %44 : vector<2x384xf32>
    %46 = vector.extract_strided_slice %45 {offsets = [0, 0], sizes = [2, 128], strides = [1, 1]} : vector<2x384xf32> to vector<2x128xf32>
    %47 = vector.extract_strided_slice %45 {offsets = [0, 128], sizes = [2, 128], strides = [1, 1]} : vector<2x384xf32> to vector<2x128xf32>
    %48 = vector.extract_strided_slice %45 {offsets = [0, 256], sizes = [2, 128], strides = [1, 1]} : vector<2x384xf32> to vector<2x128xf32>
    %49 = arith.addf %46, %7 : vector<2x128xf32>
    %50 = arith.negf %49 : vector<2x128xf32>
    %51 = math.exp %50 : vector<2x128xf32>
    %cst_25 = arith.constant 1.000000e+00 : f32
    %52 = vector.broadcast %cst_25 : f32 to vector<2x128xf32>
    %53 = arith.addf %52, %51 : vector<2x128xf32>
    %54 = arith.divf %52, %53 : vector<2x128xf32>
    %55 = arith.addf %47, %8 : vector<2x128xf32>
    %56 = arith.negf %55 : vector<2x128xf32>
    %57 = math.exp %56 : vector<2x128xf32>
    %cst_26 = arith.constant 1.000000e+00 : f32
    %58 = vector.broadcast %cst_26 : f32 to vector<2x128xf32>
    %59 = arith.addf %58, %57 : vector<2x128xf32>
    %60 = arith.divf %58, %59 : vector<2x128xf32>
    %61 = arith.mulf %54, %9 : vector<2x128xf32>
    %62 = arith.addf %48, %61 : vector<2x128xf32>
    %63 = math.tanh %62 : vector<2x128xf32>
    %cst_27 = arith.constant 1.000000e+00 : f32
    %64 = vector.broadcast %cst_27 : f32 to vector<2x128xf32>
    %65 = arith.subf %64, %60 : vector<2x128xf32>
    %66 = arith.mulf %65, %63 : vector<2x128xf32>
    %67 = arith.mulf %60, %0 : vector<2x128xf32>
    %68 = arith.addf %66, %67 : vector<2x128xf32>
    %c0_28 = arith.constant 0 : index
    %c0_29 = arith.constant 0 : index
    %69 = vector.load %arg9[%c0_28, %c0_29] : memref<2x128xf32, #tpu.memory_space<vmem>>, vector<2x128xf32>
    tpu.vector_store %arg9[%c0_28, %c0_29], %68 {strides = array<i32>} : memref<2x128xf32, #tpu.memory_space<vmem>>, vector<2x128xf32>,
    return
  }
}

</mosaic_0001>

<llo_original>
// kernel: tpu_custom_call.1
$region0: #{tpu_custom_call.1}
  #allocation0 [shape = 'u32[]', space=smem, size = 0x4, offset = 0x4, fixed_abs, tag = 'smem constant byte address 0x4 - core index']
  #allocation1 [shape = 'u32[144,128]{1,0:T(1,128)}', space=vmem, size = 0x12000, scoped, tag = 'internal scratch']
  %s0 = inlined_call_operand.hbm [shape: f32[2,128], index: 0, kind: input, shape index: {}]
  %s1 = inlined_call_operand.hbm [shape: f32[16,192], index: 1, kind: input, shape index: {}]
  %s2 = inlined_call_operand.hbm [shape: f32[2,38], index: 2, kind: input, shape index: {}]
  %s3 = inlined_call_operand.hbm [shape: f32[192,512], index: 3, kind: input, shape index: {}]
  %s4 = inlined_call_operand.hbm [shape: f32[128,512], index: 4, kind: input, shape index: {}]
  %s5 = inlined_call_operand.hbm [shape: f32[38,384], index: 5, kind: input, shape index: {}]
  %s6 = inlined_call_operand.vmem [shape: f32[1,128], index: 6, kind: input, shape index: {}]
  %s7 = inlined_call_operand.vmem [shape: f32[1,512], index: 7, kind: input, shape index: {}]
  %s8 = inlined_call_operand.vmem [shape: f32[1,384], index: 8, kind: input, shape index: {}]
  %s9 = inlined_call_operand.hbm [shape: f32[2,128], index: 9, kind: output, shape index: {0}]
  %s10 = inlined_call_operand.hbm [shape: f32[2,8], index: 10, kind: output, shape index: {1}]
  %11 = xla_tuple %s9, %s10
  %s12 = sld [smem:[#allocation0]]
  $region78: #{tpu_custom_call.1} parent=0
    _
  %s14 = ssub.s32 1, %s12
  %s15 = scalar_select 0, %s14, %s12
  $region1: #{tpu_custom_call.1} parent=0
    #allocation2 [shape = 'u8[1024]{0}', space=vmem, size = 0x400, scoped, tag = 'input window, operand 0, single buffered']
    #allocation3 [shape = 's32[1]{0}', space=sflag, size = 0x4, scoped, tag = 'scoped memory for tpu_custom_call.1']
    #allocation4 [shape = 's32[1]{0}', space=sflag, size = 0x4, scoped, tag = 'scoped memory for tpu_custom_call.1']
    #allocation5 [shape = 'u8[16384]{0}', space=vmem, size = 0x4000, scoped, tag = 'input window, operand 1, single buffered']
    #allocation6 [shape = 's32[1]{0}', space=sflag, size = 0x4, scoped, tag = 'scoped memory for tpu_custom_call.1']
    #allocation7 [shape = 'u8[1024]{0}', space=vmem, size = 0x400, scoped, tag = 'input window, operand 2, single buffered']
    #allocation8 [shape = 'u8[393216]{0}', space=vmem, size = 0x60000, scoped, tag = 'input window, operand 3, single buffered']
    #allocation9 [shape = 's32[1]{0}', space=sflag, size = 0x4, scoped, tag = 'scoped memory for tpu_custom_call.1']
    #allocation10 [shape = 'u8[262144]{0}', space=vmem, size = 0x40000, scoped, tag = 'input window, operand 4, single buffered']
    #allocation11 [shape = 'u8[61440]{0}', space=vmem, size = 0xf000, scoped, tag = 'input window, operand 5, single buffered']
    #allocation12 [shape = 's32[1]{0}', space=sflag, size = 0x4, scoped, tag = 'scoped memory for tpu_custom_call.1']
    #allocation13 [shape = 'u8[1024]{0}', space=vmem, size = 0x400, scoped, tag = 'output window, operand 0, single buffered']
    #allocation14 [shape = 'u8[1024]{0}', space=vmem, size = 0x400, scoped, tag = 'output window, operand 1, single buffered']
    #allocation15 [shape = 's32[1]{0}', space=sflag, size = 0x4, scoped, tag = 'scoped memory for tpu_custom_call.1']
    %16 = vsyncpa [#allocation3], 0
    %17 = vsyncpa [#allocation6], 0
    %18 = vsyncpa [#allocation9], 0
    %19 = vsyncpa [#allocation12], 0
    %20 = vsyncpa [#allocation4], 0
    %21 = vsyncpa [#allocation15], 0
    // Predicated region
    $region2: #{tpu_custom_call.1} parent=1 // pred_check
      _
    $region3: #{tpu_custom_call.1} parent=1 // pred_check_branch
      %23 = sbr.rel (0) target = $region5
    $region4: #{tpu_custom_call.1} parent=1 // pred_region
      %s25 = ssub.s32 32, 32
      %26 = vsyncadd [#allocation3], %s25
      %s28 = sshll.u32 [#allocation2], 4
      %s29 = int_to_ptr.vmem [resolvable:$true] %s28
      %31 = dma.hbm_to_vmem [thread:$0]  %s0, 32, %s29, [#allocation3]
    $region5: #{tpu_custom_call.1} parent=1 // pred_fallthru
      _
    // Predicated region
    $region6: #{tpu_custom_call.1} parent=1 // pred_check
      _
    $region7: #{tpu_custom_call.1} parent=1 // pred_check_branch
      %33 = sbr.rel (0) target = $region9
    $region8: #{tpu_custom_call.1} parent=1 // pred_region
      %s35 = ssub.s32 512, 512
      %36 = vsyncadd [#allocation6], %s35
      %s37 = sshll.u32 [#allocation5], 4
      %s38 = int_to_ptr.vmem [resolvable:$true] %s37
      %43 = dma.hbm_to_vmem [thread:$0]  %s1, 512, %s38, [#allocation6], 256, 256, 16
    $region9: #{tpu_custom_call.1} parent=1 // pred_fallthru
      _
    // Predicated region
    $region10: #{tpu_custom_call.1} parent=1 // pred_check
      _
    $region11: #{tpu_custom_call.1} parent=1 // pred_check_branch
      %45 = sbr.rel (0) target = $region13
    $region12: #{tpu_custom_call.1} parent=1 // pred_region
      %s47 = ssub.s32 32, 32
      %48 = vsyncadd [#allocation6], %s47
      %s50 = sshll.u32 [#allocation7], 4
      %s51 = int_to_ptr.vmem [resolvable:$true] %s50
      %53 = dma.hbm_to_vmem [thread:$0]  %s2, 32, %s51, [#allocation6]
    $region13: #{tpu_custom_call.1} parent=1 // pred_fallthru
      _
    // Predicated region
    $region14: #{tpu_custom_call.1} parent=1 // pred_check
      _
    $region15: #{tpu_custom_call.1} parent=1 // pred_check_branch
      %55 = sbr.rel (0) target = $region17
    $region16: #{tpu_custom_call.1} parent=1 // pred_region
      %s57 = ssub.s32 12288, 12288
      %58 = vsyncadd [#allocation9], %s57
      %s59 = sshll.u32 [#allocation8], 4
      %s60 = int_to_ptr.vmem [resolvable:$true] %s59
      %65 = dma.hbm_to_vmem [thread:$0]  %s3, 12288, %s60, [#allocation9], 512, 512, 32
    $region17: #{tpu_custom_call.1} parent=1 // pred_fallthru
      _
    // Predicated region
    $region18: #{tpu_custom_call.1} parent=1 // pred_check
      _
    $region19: #{tpu_custom_call.1} parent=1 // pred_check_branch
      %67 = sbr.rel (0) target = $region21
    $region20: #{tpu_custom_call.1} parent=1 // pred_region
      %s69 = ssub.s32 8192, 8192
      %70 = vsyncadd [#allocation9], %s69
      %s71 = sshll.u32 [#allocation10], 4
      %s72 = int_to_ptr.vmem [resolvable:$true] %s71
      %77 = dma.hbm_to_vmem [thread:$0]  %s4, 8192, %s72, [#allocation9], 512, 512, 32
    $region21: #{tpu_custom_call.1} parent=1 // pred_fallthru
      _
    // Predicated region
    $region22: #{tpu_custom_call.1} parent=1 // pred_check
      _
    $region23: #{tpu_custom_call.1} parent=1 // pred_check_branch
      %79 = sbr.rel (0) target = $region25
    $region24: #{tpu_custom_call.1} parent=1 // pred_region
      %s81 = ssub.s32 1920, 1920
      %82 = vsyncadd [#allocation12], %s81
      %s83 = sshll.u32 [#allocation11], 4
      %s84 = int_to_ptr.vmem [resolvable:$true] %s83
      %89 = dma.hbm_to_vmem [thread:$0]  %s5, 1920, %s84, [#allocation12], 384, 384, 24
    $region25: #{tpu_custom_call.1} parent=1 // pred_fallthru
      _
    // Predicated region
    $region26: #{tpu_custom_call.1} parent=1 // pred_check
      _
    $region27: #{tpu_custom_call.1} parent=1 // pred_check_branch
      %91 = sbr.rel (0) target = $region29
    $region28: #{tpu_custom_call.1} parent=1 // pred_region
      _
    $region29: #{tpu_custom_call.1} parent=1 // pred_fallthru
      _
    // Predicated region
    $region30: #{tpu_custom_call.1} parent=1 // pred_check
      _
    $region31: #{tpu_custom_call.1} parent=1 // pred_check_branch
      %93 = sbr.rel (0) target = $region33
    $region32: #{tpu_custom_call.1} parent=1 // pred_region
      _
    $region33: #{tpu_custom_call.1} parent=1 // pred_fallthru
      _
    // Predicated region
    $region34: #{tpu_custom_call.1} parent=1 // pred_check
      _
    $region35: #{tpu_custom_call.1} parent=1 // pred_check_branch
      %95 = sbr.rel (0) target = $region37
    $region36: #{tpu_custom_call.1} parent=1 // pred_region
      _
    $region37: #{tpu_custom_call.1} parent=1 // pred_fallthru
      _
    // Predicated region
    $region38: #{tpu_custom_call.1} parent=1 // pred_check
      _
    $region39: #{tpu_custom_call.1} parent=1 // pred_check_branch
      %97 = sbr.rel (0) target = $region41
    $region40: #{tpu_custom_call.1} parent=1 // pred_region
      %98 = dma.done [#allocation3], 32
    $region41: #{tpu_custom_call.1} parent=1 // pred_fallthru
      _
    // Predicated region
    $region42: #{tpu_custom_call.1} parent=1 // pred_check
      _
    $region43: #{tpu_custom_call.1} parent=1 // pred_check_branch
      %100 = sbr.rel (0) target = $region45
    $region44: #{tpu_custom_call.1} parent=1 // pred_region
      %101 = dma.done [#allocation6], 512
    $region45: #{tpu_custom_call.1} parent=1 // pred_fallthru
      _
    // Predicated region
    $region46: #{tpu_custom_call.1} parent=1 // pred_check
      _
    $region47: #{tpu_custom_call.1} parent=1 // pred_check_branch
      %103 = sbr.rel (0) target = $region49
    $region48: #{tpu_custom_call.1} parent=1 // pred_region
      %104 = dma.done [#allocation6], 32
    $region49: #{tpu_custom_call.1} parent=1 // pred_fallthru
      _
    // Predicated region
    $region50: #{tpu_custom_call.1} parent=1 // pred_check
      _
    $region51: #{tpu_custom_call.1} parent=1 // pred_check_branch
      %106 = sbr.rel (0) target = $region53
    $region52: #{tpu_custom_call.1} parent=1 // pred_region
      %107 = dma.done [#allocation9], 12288
    $region53: #{tpu_custom_call.1} parent=1 // pred_fallthru
      _
    // Predicated region
    $region54: #{tpu_custom_call.1} parent=1 // pred_check
      _
    $region55: #{tpu_custom_call.1} parent=1 // pred_check_branch
      %109 = sbr.rel (0) target = $region57
    $region56: #{tpu_custom_call.1} parent=1 // pred_region
      %110 = dma.done [#allocation9], 8192
    $region57: #{tpu_custom_call.1} parent=1 // pred_fallthru
      _
    // Predicated region
    $region58: #{tpu_custom_call.1} parent=1 // pred_check
      _
    $region59: #{tpu_custom_call.1} parent=1 // pred_check_branch
      %112 = sbr.rel (0) target = $region61
    $region60: #{tpu_custom_call.1} parent=1 // pred_region
      %113 = dma.done [#allocation12], 1920
    $region61: #{tpu_custom_call.1} parent=1 // pred_fallthru
      _
    %v114 = vld [vmem:[#allocation2] sm:$0x3]
    %v115 = vld [vmem:[#allocation10] sm:$0xff]
    %v116 = vld [vmem:[#allocation10 + $0x8] sm:$0xff]
    %v117 = vld [vmem:[#allocation10 + $0x10] sm:$0xff]
    %v118 = vld [vmem:[#allocation10 + $0x18] sm:$0xff]
    %v119 = vld [vmem:[#allocation10 + $0x20] sm:$0xff]
    %v120 = vld [vmem:[#allocation10 + $0x28] sm:$0xff]
    %v121 = vld [vmem:[#allocation10 + $0x30] sm:$0xff]
    %v122 = vld [vmem:[#allocation10 + $0x38] sm:$0xff]
    %v123 = vld [vmem:[#allocation10 + $0x40] sm:$0xff]
    %v124 = vld [vmem:[#allocation10 + $0x48] sm:$0xff]
    %v125 = vld [vmem:[#allocation10 + $0x50] sm:$0xff]
    %v126 = vld [vmem:[#allocation10 + $0x58] sm:$0xff]
    %v127 = vld [vmem:[#allocation10 + $0x60] sm:$0xff]
    %v128 = vld [vmem:[#allocation10 + $0x68] sm:$0xff]
    %v129 = vld [vmem:[#allocation10 + $0x70] sm:$0xff]
    %v130 = vld [vmem:[#allocation10 + $0x78] sm:$0xff]
    %v131 = vld [vmem:[#allocation10 + $0x80] sm:$0xff]
    %v132 = vld [vmem:[#allocation10 + $0x88] sm:$0xff]
    %v133 = vld [vmem:[#allocation10 + $0x90] sm:$0xff]
    %v134 = vld [vmem:[#allocation10 + $0x98] sm:$0xff]
    %v135 = vld [vmem:[#allocation10 + $0xa0] sm:$0xff]
    %v136 = vld [vmem:[#allocation10 + $0xa8] sm:$0xff]
    %v137 = vld [vmem:[#allocation10 + $0xb0] sm:$0xff]
    %v138 = vld [vmem:[#allocation10 + $0xb8] sm:$0xff]
    %v139 = vld [vmem:[#allocation10 + $0xc0] sm:$0xff]
    %v140 = vld [vmem:[#allocation10 + $0xc8] sm:$0xff]
    %v141 = vld [vmem:[#allocation10 + $0xd0] sm:$0xff]
    %v142 = vld [vmem:[#allocation10 + $0xd8] sm:$0xff]
    %v143 = vld [vmem:[#allocation10 + $0xe0] sm:$0xff]
    %v144 = vld [vmem:[#allocation10 + $0xe8] sm:$0xff]
    %v145 = vld [vmem:[#allocation10 + $0xf0] sm:$0xff]
    %v146 = vld [vmem:[#allocation10 + $0xf8] sm:$0xff]
    %v147 = vld [vmem:[#allocation10 + $0x100] sm:$0xff]
    %v148 = vld [vmem:[#allocation10 + $0x108] sm:$0xff]
    %v149 = vld [vmem:[#allocation10 + $0x110] sm:$0xff]
    %v150 = vld [vmem:[#allocation10 + $0x118] sm:$0xff]
    %v151 = vld [vmem:[#allocation10 + $0x120] sm:$0xff]
    %v152 = vld [vmem:[#allocation10 + $0x128] sm:$0xff]
    %v153 = vld [vmem:[#allocation10 + $0x130] sm:$0xff]
    %v154 = vld [vmem:[#allocation10 + $0x138] sm:$0xff]
    %v155 = vld [vmem:[#allocation10 + $0x140] sm:$0xff]
    %v156 = vld [vmem:[#allocation10 + $0x148] sm:$0xff]
    %v157 = vld [vmem:[#allocation10 + $0x150] sm:$0xff]
    %v158 = vld [vmem:[#allocation10 + $0x158] sm:$0xff]
    %v159 = vld [vmem:[#allocation10 + $0x160] sm:$0xff]
    %v160 = vld [vmem:[#allocation10 + $0x168] sm:$0xff]
    %v161 = vld [vmem:[#allocation10 + $0x170] sm:$0xff]
    %v162 = vld [vmem:[#allocation10 + $0x178] sm:$0xff]
    %v163 = vld [vmem:[#allocation10 + $0x180] sm:$0xff]
    %v164 = vld [vmem:[#allocation10 + $0x188] sm:$0xff]
    %v165 = vld [vmem:[#allocation10 + $0x190] sm:$0xff]
    %v166 = vld [vmem:[#allocation10 + $0x198] sm:$0xff]
    %v167 = vld [vmem:[#allocation10 + $0x1a0] sm:$0xff]
    %v168 = vld [vmem:[#allocation10 + $0x1a8] sm:$0xff]
    %v169 = vld [vmem:[#allocation10 + $0x1b0] sm:$0xff]
    %v170 = vld [vmem:[#allocation10 + $0x1b8] sm:$0xff]
    %v171 = vld [vmem:[#allocation10 + $0x1c0] sm:$0xff]
    %v172 = vld [vmem:[#allocation10 + $0x1c8] sm:$0xff]
    %v173 = vld [vmem:[#allocation10 + $0x1d0] sm:$0xff]
    %v174 = vld [vmem:[#allocation10 + $0x1d8] sm:$0xff]
    %v175 = vld [vmem:[#allocation10 + $0x1e0] sm:$0xff]
    %v176 = vld [vmem:[#allocation10 + $0x1e8] sm:$0xff]
    %v177 = vld [vmem:[#allocation10 + $0x1f0] sm:$0xff]
    %v178 = vld [vmem:[#allocation10 + $0x1f8] sm:$0xff]
    %v179 = vld [vmem:[%s7] sm:$0xf]
    %v181 = vlaneseq
    %v182 = vshrl.u32 %v181, 7
    %v183 = vsub.s32 0, %v182
    %v184 = vrot.slane %v179, %v183
    %v185 = vlaneseq
    %v186 = vshrl.u32 %v185, 7
    %v187 = vsub.s32 1, %v186
    %v188 = vrot.slane %v179, %v187
    %v189 = vlaneseq
    %v190 = vshrl.u32 %v189, 7
    %v191 = vsub.s32 2, %v190
    %v192 = vrot.slane %v179, %v191
    %v193 = vlaneseq
    %v194 = vshrl.u32 %v193, 7
    %v195 = vsub.s32 3, %v194
    %v196 = vrot.slane %v179, %v195
    %201 = vmatprep.subr.mxu0 %v116
    %202 = vmatpush1.msra.mxu0 %v115
    %203 = vmatprep.subr.mxu0 %v120
    %204 = vmatpush1.msra.mxu0 %v119
    %205 = vmatprep.subr.mxu0 %v124
    %206 = vmatpush1.msra.mxu0 %v123
    %207 = vmatprep.subr.mxu0 %v128
    %208 = vmatpush1.msra.mxu0 %v127
    %209 = vmatprep.subr.mxu0 %v132
    %210 = vmatpush1.msra.mxu0 %v131
    %211 = vmatprep.subr.mxu0 %v136
    %212 = vmatpush1.msra.mxu0 %v135
    %213 = vmatprep.subr.mxu0 %v140
    %214 = vmatpush1.msra.mxu0 %v139
    %215 = vmatprep.subr.mxu0 %v144
    %216 = vmatpush1.msra.mxu0 %v143
    %217 = vmatprep.subr.mxu0 %v148
    %218 = vmatpush1.msra.mxu0 %v147
    %219 = vmatprep.subr.mxu0 %v152
    %220 = vmatpush1.msra.mxu0 %v151
    %221 = vmatprep.subr.mxu0 %v156
    %222 = vmatpush1.msra.mxu0 %v155
    %223 = vmatprep.subr.mxu0 %v160
    %224 = vmatpush1.msra.mxu0 %v159
    %225 = vmatprep.subr.mxu0 %v164
    %226 = vmatpush1.msra.mxu0 %v163
    %227 = vmatprep.subr.mxu0 %v168
    %228 = vmatpush1.msra.mxu0 %v167
    %229 = vmatprep.subr.mxu0 %v172
    %230 = vmatpush1.msra.mxu0 %v171
    %231 = vmatprep.subr.mxu0 %v176
    %232 = vmatpush1.msra.mxu0 %v175
    %233 = vmatprep.subr.mxu0 0.0
    %234 = vmatpush1.msra.mxu0 0.0
    %235 = vmatprep.subr.mxu0 0.0
    %236 = vmatpush1.msra.mxu0 0.0
    %237 = vmatprep.subr.mxu0 0.0
    %238 = vmatpush1.msra.mxu0 0.0
    %239 = vmatprep.subr.mxu0 0.0
    %240 = vmatpush1.msra.mxu0 0.0
    %241 = vmatprep.subr.mxu0 0.0
    %242 = vmatpush1.msra.mxu0 0.0
    %243 = vmatprep.subr.mxu0 0.0
    %244 = vmatpush1.msra.mxu0 0.0
    %245 = vmatprep.subr.mxu0 0.0
    %246 = vmatpush1.msra.mxu0 0.0
    %247 = vmatprep.subr.mxu0 0.0
    %248 = vmatpush1.msra.mxu0 0.0
    %249 = vmatprep.subr.mxu0 0.0
    %250 = vmatpush1.msra.mxu0 0.0
    %251 = vmatprep.subr.mxu0 0.0
    %252 = vmatpush1.msra.mxu0 0.0
    %253 = vmatprep.subr.mxu0 0.0
    %254 = vmatpush1.msra.mxu0 0.0
    %255 = vmatprep.subr.mxu0 0.0
    %256 = vmatpush1.msra.mxu0 0.0
    %257 = vmatprep.subr.mxu0 0.0
    %258 = vmatpush1.msra.mxu0 0.0
    %259 = vmatprep.subr.mxu0 0.0
    %260 = vmatpush1.msra.mxu0 0.0
    %261 = vmatprep.subr.mxu0 0.0
    %262 = vmatpush1.msra.mxu0 0.0
    %263 = vmatprep.subr.mxu0 0.0
    %264 = vmatpush1.msra.mxu0 0.0
    %265 = vmatprep.mubr.f32.mxu0 0.0
    %266 = vmatmul.mubr.f32.gmra.mrb[0].mxu0 %v114
    %v267 = vpop.f32.mrb[0].mxu0
    %v268 = vadd.f32 %v184, %v267
    %v269 = vpop.f32.mrb[0].mxu0
    %v270 = vadd.f32 %v188, %v269
    %271 = vdwg.mxu0
    %272 = vmatprep.subr.mxu0 %v118
    %273 = vmatpush1.msra.mxu0 %v117
    %274 = vmatprep.subr.mxu0 %v122
    %275 = vmatpush1.msra.mxu0 %v121
    %276 = vmatprep.subr.mxu0 %v126
    %277 = vmatpush1.msra.mxu0 %v125
    %278 = vmatprep.subr.mxu0 %v130
    %279 = vmatpush1.msra.mxu0 %v129
    %280 = vmatprep.subr.mxu0 %v134
    %281 = vmatpush1.msra.mxu0 %v133
    %282 = vmatprep.subr.mxu0 %v138
    %283 = vmatpush1.msra.mxu0 %v137
    %284 = vmatprep.subr.mxu0 %v142
    %285 = vmatpush1.msra.mxu0 %v141
    %286 = vmatprep.subr.mxu0 %v146
    %287 = vmatpush1.msra.mxu0 %v145
    %288 = vmatprep.subr.mxu0 %v150
    %289 = vmatpush1.msra.mxu0 %v149
    %290 = vmatprep.subr.mxu0 %v154
    %291 = vmatpush1.msra.mxu0 %v153
    %292 = vmatprep.subr.mxu0 %v158
    %293 = vmatpush1.msra.mxu0 %v157
    %294 = vmatprep.subr.mxu0 %v162
    %295 = vmatpush1.msra.mxu0 %v161
    %296 = vmatprep.subr.mxu0 %v166
    %297 = vmatpush1.msra.mxu0 %v165
    %298 = vmatprep.subr.mxu0 %v170
    %299 = vmatpush1.msra.mxu0 %v169
    %300 = vmatprep.subr.mxu0 %v174
    %301 = vmatpush1.msra.mxu0 %v173
    %302 = vmatprep.subr.mxu0 %v178
    %303 = vmatpush1.msra.mxu0 %v177
    %304 = vmatprep.subr.mxu0 0.0
    %305 = vmatpush1.msra.mxu0 0.0
    %306 = vmatprep.subr.mxu0 0.0
    %307 = vmatpush1.msra.mxu0 0.0
    %308 = vmatprep.subr.mxu0 0.0
    %309 = vmatpush1.msra.mxu0 0.0
    %310 = vmatprep.subr.mxu0 0.0
    %311 = vmatpush1.msra.mxu0 0.0
    %312 = vmatprep.subr.mxu0 0.0
    %313 = vmatpush1.msra.mxu0 0.0
    %314 = vmatprep.subr.mxu0 0.0
    %315 = vmatpush1.msra.mxu0 0.0
    %316 = vmatprep.subr.mxu0 0.0
    %317 = vmatpush1.msra.mxu0 0.0
    %318 = vmatprep.subr.mxu0 0.0
    %319 = vmatpush1.msra.mxu0 0.0
    %320 = vmatprep.subr.mxu0 0.0
    %321 = vmatpush1.msra.mxu0 0.0
    %322 = vmatprep.subr.mxu0 0.0
    %323 = vmatpush1.msra.mxu0 0.0
    %324 = vmatprep.subr.mxu0 0.0
    %325 = vmatpush1.msra.mxu0 0.0
    %326 = vmatprep.subr.mxu0 0.0
    %327 = vmatpush1.msra.mxu0 0.0
    %328 = vmatprep.subr.mxu0 0.0
    %329 = vmatpush1.msra.mxu0 0.0
    %330 = vmatprep.subr.mxu0 0.0
    %331 = vmatpush1.msra.mxu0 0.0
    %332 = vmatprep.subr.mxu0 0.0
    %333 = vmatpush1.msra.mxu0 0.0
    %334 = vmatprep.subr.mxu0 0.0
    %335 = vmatpush1.msra.mxu0 0.0
    %336 = vmatprep.mubr.f32.mxu0 0.0
    %337 = vmatmul.mubr.f32.gmra.mrb[0].mxu0 %v114
    %v338 = vpop.f32.mrb[0].mxu0
    %v339 = vadd.f32 %v192, %v338
    %v340 = vpop.f32.mrb[0].mxu0
    %v341 = vadd.f32 %v196, %v340
    %342 = vdwg.mxu0
    %v343 = vld [vmem:[#allocation5] sm:$0xff]
    %v344 = vld [vmem:[#allocation5 + $0x8] sm:$0xff]
    %v345 = vld [vmem:[#allocation5 + $0x10] sm:$0xff]
    %v346 = vld [vmem:[#allocation5 + $0x18] sm:$0xff]
    %v347 = vld [vmem:[#allocation8] sm:$0xff]
    %v348 = vld [vmem:[#allocation8 + $0x8] sm:$0xff]
    %v349 = vld [vmem:[#allocation8 + $0x10] sm:$0xff]
    %v350 = vld [vmem:[#allocation8 + $0x18] sm:$0xff]
    %v351 = vld [vmem:[#allocation8 + $0x20] sm:$0xff]
    %v352 = vld [vmem:[#allocation8 + $0x28] sm:$0xff]
    %v353 = vld [vmem:[#allocation8 + $0x30] sm:$0xff]
    %v354 = vld [vmem:[#allocation8 + $0x38] sm:$0xff]
    %v355 = vld [vmem:[#allocation8 + $0x40] sm:$0xff]
    %v356 = vld [vmem:[#allocation8 + $0x48] sm:$0xff]
    %v357 = vld [vmem:[#allocation8 + $0x50] sm:$0xff]
    %v358 = vld [vmem:[#allocation8 + $0x58] sm:$0xff]
    %v359 = vld [vmem:[#allocation8 + $0x60] sm:$0xff]
    %v360 = vld [vmem:[#allocation8 + $0x68] sm:$0xff]
    %v361 = vld [vmem:[#allocation8 + $0x70] sm:$0xff]
    %v362 = vld [vmem:[#allocation8 + $0x78] sm:$0xff]
    %v363 = vld [vmem:[#allocation8 + $0x80] sm:$0xff]
    %v364 = vld [vmem:[#allocation8 + $0x88] sm:$0xff]
    %v365 = vld [vmem:[#allocation8 + $0x90] sm:$0xff]
    %v366 = vld [vmem:[#allocation8 + $0x98] sm:$0xff]
    %v367 = vld [vmem:[#allocation8 + $0xa0] sm:$0xff]
    %v368 = vld [vmem:[#allocation8 + $0xa8] sm:$0xff]
    %v369 = vld [vmem:[#allocation8 + $0xb0] sm:$0xff]
    %v370 = vld [vmem:[#allocation8 + $0xb8] sm:$0xff]
    %v371 = vld [vmem:[#allocation8 + $0xc0] sm:$0xff]
    %v372 = vld [vmem:[#allocation8 + $0xc8] sm:$0xff]
    %v373 = vld [vmem:[#allocation8 + $0xd0] sm:$0xff]
    %v374 = vld [vmem:[#allocation8 + $0xd8] sm:$0xff]
    %v375 = vld [vmem:[#allocation8 + $0xe0] sm:$0xff]
    %v376 = vld [vmem:[#allocation8 + $0xe8] sm:$0xff]
    %v377 = vld [vmem:[#allocation8 + $0xf0] sm:$0xff]
    %v378 = vld [vmem:[#allocation8 + $0xf8] sm:$0xff]
    %v379 = vld [vmem:[#allocation8 + $0x100] sm:$0xff]
    %v380 = vld [vmem:[#allocation8 + $0x108] sm:$0xff]
    %v381 = vld [vmem:[#allocation8 + $0x110] sm:$0xff]
    %v382 = vld [vmem:[#allocation8 + $0x118] sm:$0xff]
    %v383 = vld [vmem:[#allocation8 + $0x120] sm:$0xff]
    %v384 = vld [vmem:[#allocation8 + $0x128] sm:$0xff]
    %v385 = vld [vmem:[#allocation8 + $0x130] sm:$0xff]
    %v386 = vld [vmem:[#allocation8 + $0x138] sm:$0xff]
    %v387 = vld [vmem:[#allocation8 + $0x140] sm:$0xff]
    %v388 = vld [vmem:[#allocation8 + $0x148] sm:$0xff]
    %v389 = vld [vmem:[#allocation8 + $0x150] sm:$0xff]
    %v390 = vld [vmem:[#allocation8 + $0x158] sm:$0xff]
    %v391 = vld [vmem:[#allocation8 + $0x160] sm:$0xff]
    %v392 = vld [vmem:[#allocation8 + $0x168] sm:$0xff]
    %v393 = vld [vmem:[#allocation8 + $0x170] sm:$0xff]
    %v394 = vld [vmem:[#allocation8 + $0x178] sm:$0xff]
    %v395 = vld [vmem:[#allocation8 + $0x180] sm:$0xff]
    %v396 = vld [vmem:[#allocation8 + $0x188] sm:$0xff]
    %v397 = vld [vmem:[#allocation8 + $0x190] sm:$0xff]
    %v398 = vld [vmem:[#allocation8 + $0x198] sm:$0xff]
    %v399 = vld [vmem:[#allocation8 + $0x1a0] sm:$0xff]
    %v400 = vld [vmem:[#allocation8 + $0x1a8] sm:$0xff]
    %v401 = vld [vmem:[#allocation8 + $0x1b0] sm:$0xff]
    %v402 = vld [vmem:[#allocation8 + $0x1b8] sm:$0xff]
    %v403 = vld [vmem:[#allocation8 + $0x1c0] sm:$0xff]
    %v404 = vld [vmem:[#allocation8 + $0x1c8] sm:$0xff]
    %v405 = vld [vmem:[#allocation8 + $0x1d0] sm:$0xff]
    %v406 = vld [vmem:[#allocation8 + $0x1d8] sm:$0xff]
    %v407 = vld [vmem:[#allocation8 + $0x1e0] sm:$0xff]
    %v408 = vld [vmem:[#allocation8 + $0x1e8] sm:$0xff]
    %v409 = vld [vmem:[#allocation8 + $0x1f0] sm:$0xff]
    %v410 = vld [vmem:[#allocation8 + $0x1f8] sm:$0xff]
    %v411 = vld [vmem:[#allocation8 + $0x200] sm:$0xff]
    %v412 = vld [vmem:[#allocation8 + $0x208] sm:$0xff]
    %v413 = vld [vmem:[#allocation8 + $0x210] sm:$0xff]
    %v414 = vld [vmem:[#allocation8 + $0x218] sm:$0xff]
    %v415 = vld [vmem:[#allocation8 + $0x220] sm:$0xff]
    %v416 = vld [vmem:[#allocation8 + $0x228] sm:$0xff]
    %v417 = vld [vmem:[#allocation8 + $0x230] sm:$0xff]
    %v418 = vld [vmem:[#allocation8 + $0x238] sm:$0xff]
    %v419 = vld [vmem:[#allocation8 + $0x240] sm:$0xff]
    %v420 = vld [vmem:[#allocation8 + $0x248] sm:$0xff]
    %v421 = vld [vmem:[#allocation8 + $0x250] sm:$0xff]
    %v422 = vld [vmem:[#allocation8 + $0x258] sm:$0xff]
    %v423 = vld [vmem:[#allocation8 + $0x260] sm:$0xff]
    %v424 = vld [vmem:[#allocation8 + $0x268] sm:$0xff]
    %v425 = vld [vmem:[#allocation8 + $0x270] sm:$0xff]
    %v426 = vld [vmem:[#allocation8 + $0x278] sm:$0xff]
    %v427 = vld [vmem:[#allocation8 + $0x280] sm:$0xff]
    %v428 = vld [vmem:[#allocation8 + $0x288] sm:$0xff]
    %v429 = vld [vmem:[#allocation8 + $0x290] sm:$0xff]
    %v430 = vld [vmem:[#allocation8 + $0x298] sm:$0xff]
    %v431 = vld [vmem:[#allocation8 + $0x2a0] sm:$0xff]
    %v432 = vld [vmem:[#allocation8 + $0x2a8] sm:$0xff]
    %v433 = vld [vmem:[#allocation8 + $0x2b0] sm:$0xff]
    %v434 = vld [vmem:[#allocation8 + $0x2b8] sm:$0xff]
    %v435 = vld [vmem:[#allocation8 + $0x2c0] sm:$0xff]
    %v436 = vld [vmem:[#allocation8 + $0x2c8] sm:$0xff]
    %v437 = vld [vmem:[#allocation8 + $0x2d0] sm:$0xff]
    %v438 = vld [vmem:[#allocation8 + $0x2d8] sm:$0xff]
    %v439 = vld [vmem:[#allocation8 + $0x2e0] sm:$0xff]
    %v440 = vld [vmem:[#allocation8 + $0x2e8] sm:$0xff]
    %v441 = vld [vmem:[#allocation8 + $0x2f0] sm:$0xff]
    %v442 = vld [vmem:[#allocation8 + $0x2f8] sm:$0xff]
    %vm443 = vcmask 523264
    %v445 = vsel %vm443, %v344, 0
    %v448 = vsel %vm443, %v346, 0
    %450 = vmatprep.subr.mxu0 %v348
    %451 = vmatpush1.msra.mxu0 %v347
    %452 = vmatprep.subr.mxu0 %v352
    %453 = vmatpush1.msra.mxu0 %v351
    %454 = vmatprep.subr.mxu0 %v356
    %455 = vmatpush1.msra.mxu0 %v355
    %456 = vmatprep.subr.mxu0 %v360
    %457 = vmatpush1.msra.mxu0 %v359
    %458 = vmatprep.subr.mxu0 %v364
    %459 = vmatpush1.msra.mxu0 %v363
    %460 = vmatprep.subr.mxu0 %v368
    %461 = vmatpush1.msra.mxu0 %v367
    %462 = vmatprep.subr.mxu0 %v372
    %463 = vmatpush1.msra.mxu0 %v371
    %464 = vmatprep.subr.mxu0 %v376
    %465 = vmatpush1.msra.mxu0 %v375
    %466 = vmatprep.subr.mxu0 %v380
    %467 = vmatpush1.msra.mxu0 %v379
    %468 = vmatprep.subr.mxu0 %v384
    %469 = vmatpush1.msra.mxu0 %v383
    %470 = vmatprep.subr.mxu0 %v388
    %471 = vmatpush1.msra.mxu0 %v387
    %472 = vmatprep.subr.mxu0 %v392
    %473 = vmatpush1.msra.mxu0 %v391
    %474 = vmatprep.subr.mxu0 %v396
    %475 = vmatpush1.msra.mxu0 %v395
    %476 = vmatprep.subr.mxu0 %v400
    %477 = vmatpush1.msra.mxu0 %v399
    %478 = vmatprep.subr.mxu0 %v404
    %479 = vmatpush1.msra.mxu0 %v403
    %480 = vmatprep.subr.mxu0 %v408
    %481 = vmatpush1.msra.mxu0 %v407
    %482 = vmatprep.subr.mxu0 %v412
    %483 = vmatpush1.msra.mxu0 %v411
    %484 = vmatprep.subr.mxu0 %v416
    %485 = vmatpush1.msra.mxu0 %v415
    %486 = vmatprep.subr.mxu0 %v420
    %487 = vmatpush1.msra.mxu0 %v419
    %488 = vmatprep.subr.mxu0 %v424
    %489 = vmatpush1.msra.mxu0 %v423
    %490 = vmatprep.subr.mxu0 %v428
    %491 = vmatpush1.msra.mxu0 %v427
    %492 = vmatprep.subr.mxu0 %v432
    %493 = vmatpush1.msra.mxu0 %v431
    %494 = vmatprep.subr.mxu0 %v436
    %495 = vmatpush1.msra.mxu0 %v435
    %496 = vmatprep.subr.mxu0 %v440
    %497 = vmatpush1.msra.mxu0 %v439
    %498 = vmatprep.subr.mxu0 0.0
    %499 = vmatpush1.msra.mxu0 0.0
    %500 = vmatprep.subr.mxu0 0.0
    %501 = vmatpush1.msra.mxu0 0.0
    %502 = vmatprep.subr.mxu0 0.0
    %503 = vmatpush1.msra.mxu0 0.0
    %504 = vmatprep.subr.mxu0 0.0
    %505 = vmatpush1.msra.mxu0 0.0
    %506 = vmatprep.subr.mxu0 0.0
    %507 = vmatpush1.msra.mxu0 0.0
    %508 = vmatprep.subr.mxu0 0.0
    %509 = vmatpush1.msra.mxu0 0.0
    %510 = vmatprep.subr.mxu0 0.0
    %511 = vmatpush1.msra.mxu0 0.0
    %512 = vmatprep.subr.mxu0 0.0
    %513 = vmatpush1.msra.mxu0 0.0
    %514 = vmatprep.mubr.f32.mxu0 %v445
    %515 = vmatmul.mubr.f32.gmra.mrb[0].mxu0 %v343
    %v516 = vpop.f32.mrb[0].mxu0
    %v517 = vadd.f32 0.0, %v516
    %v518 = vpop.f32.mrb[0].mxu0
    %v519 = vadd.f32 0.0, %v518
    %520 = vmatprep.mubr.f32.mxu0 %v448
    %521 = vmatmul.mubr.f32.gmra.mrb[0].mxu0 %v345
    %v522 = vpop.f32.mrb[0].mxu0
    %v523 = vadd.f32 0.0, %v522
    %v524 = vpop.f32.mrb[0].mxu0
    %v525 = vadd.f32 0.0, %v524
    %526 = vdwg.mxu0
    %527 = vmatprep.subr.mxu0 %v350
    %528 = vmatpush1.msra.mxu0 %v349
    %529 = vmatprep.subr.mxu0 %v354
    %530 = vmatpush1.msra.mxu0 %v353
    %531 = vmatprep.subr.mxu0 %v358
    %532 = vmatpush1.msra.mxu0 %v357
    %533 = vmatprep.subr.mxu0 %v362
    %534 = vmatpush1.msra.mxu0 %v361
    %535 = vmatprep.subr.mxu0 %v366
    %536 = vmatpush1.msra.mxu0 %v365
    %537 = vmatprep.subr.mxu0 %v370
    %538 = vmatpush1.msra.mxu0 %v369
    %539 = vmatprep.subr.mxu0 %v374
    %540 = vmatpush1.msra.mxu0 %v373
    %541 = vmatprep.subr.mxu0 %v378
    %542 = vmatpush1.msra.mxu0 %v377
    %543 = vmatprep.subr.mxu0 %v382
    %544 = vmatpush1.msra.mxu0 %v381
    %545 = vmatprep.subr.mxu0 %v386
    %546 = vmatpush1.msra.mxu0 %v385
    %547 = vmatprep.subr.mxu0 %v390
    %548 = vmatpush1.msra.mxu0 %v389
    %549 = vmatprep.subr.mxu0 %v394
    %550 = vmatpush1.msra.mxu0 %v393
    %551 = vmatprep.subr.mxu0 %v398
    %552 = vmatpush1.msra.mxu0 %v397
    %553 = vmatprep.subr.mxu0 %v402
    %554 = vmatpush1.msra.mxu0 %v401
    %555 = vmatprep.subr.mxu0 %v406
    %556 = vmatpush1.msra.mxu0 %v405
    %557 = vmatprep.subr.mxu0 %v410
    %558 = vmatpush1.msra.mxu0 %v409
    %559 = vmatprep.subr.mxu0 %v414
    %560 = vmatpush1.msra.mxu0 %v413
    %561 = vmatprep.subr.mxu0 %v418
    %562 = vmatpush1.msra.mxu0 %v417
    %563 = vmatprep.subr.mxu0 %v422
    %564 = vmatpush1.msra.mxu0 %v421
    %565 = vmatprep.subr.mxu0 %v426
    %566 = vmatpush1.msra.mxu0 %v425
    %567 = vmatprep.subr.mxu0 %v430
    %568 = vmatpush1.msra.mxu0 %v429
    %569 = vmatprep.subr.mxu0 %v434
    %570 = vmatpush1.msra.mxu0 %v433
    %571 = vmatprep.subr.mxu0 %v438
    %572 = vmatpush1.msra.mxu0 %v437
    %573 = vmatprep.subr.mxu0 %v442
    %574 = vmatpush1.msra.mxu0 %v441
    %575 = vmatprep.subr.mxu0 0.0
    %576 = vmatpush1.msra.mxu0 0.0
    %577 = vmatprep.subr.mxu0 0.0
    %578 = vmatpush1.msra.mxu0 0.0
    %579 = vmatprep.subr.mxu0 0.0
    %580 = vmatpush1.msra.mxu0 0.0
    %581 = vmatprep.subr.mxu0 0.0
    %582 = vmatpush1.msra.mxu0 0.0
    %583 = vmatprep.subr.mxu0 0.0
    %584 = vmatpush1.msra.mxu0 0.0
    %585 = vmatprep.subr.mxu0 0.0
    %586 = vmatpush1.msra.mxu0 0.0
    %587 = vmatprep.subr.mxu0 0.0
    %588 = vmatpush1.msra.mxu0 0.0
    %589 = vmatprep.subr.mxu0 0.0
    %590 = vmatpush1.msra.mxu0 0.0
    %591 = vmatprep.mubr.f32.mxu0 %v445
    %592 = vmatmul.mubr.f32.gmra.mrb[0].mxu0 %v343
    %v593 = vpop.f32.mrb[0].mxu0
    %v594 = vadd.f32 0.0, %v593
    %v595 = vpop.f32.mrb[0].mxu0
    %v596 = vadd.f32 0.0, %v595
    %597 = vmatprep.mubr.f32.mxu0 %v448
    %598 = vmatmul.mubr.f32.gmra.mrb[0].mxu0 %v345
    %v599 = vpop.f32.mrb[0].mxu0
    %v600 = vadd.f32 0.0, %v599
    %v601 = vpop.f32.mrb[0].mxu0
    %v602 = vadd.f32 0.0, %v601
    %603 = vdwg.mxu0
    %v604 = vld [vmem:[#allocation7] sm:$0x3]
    %v605 = vld [vmem:[#allocation11] sm:$0xff]
    %v606 = vld [vmem:[#allocation11 + $0x8] sm:$0xff]
    %v607 = vld [vmem:[#allocation11 + $0x10] sm:$0xff]
    %v608 = vld [vmem:[#allocation11 + $0x18] sm:$0xff]
    %v609 = vld [vmem:[#allocation11 + $0x20] sm:$0xff]
    %v610 = vld [vmem:[#allocation11 + $0x28] sm:$0xff]
    %v611 = vld [vmem:[#allocation11 + $0x30] sm:$0xff]
    %v612 = vld [vmem:[#allocation11 + $0x38] sm:$0xff]
    %v613 = vld [vmem:[#allocation11 + $0x40] sm:$0xff]
    %v614 = vld [vmem:[#allocation11 + $0x48] sm:$0xff]
    %v615 = vld [vmem:[#allocation11 + $0x50] sm:$0xff]
    %v616 = vld [vmem:[#allocation11 + $0x58] sm:$0xff]
    %v617 = vld [vmem:[#allocation11 + $0x60] sm:$0x3f]
    %v618 = vld [vmem:[#allocation11 + $0x68] sm:$0x3f]
    %v619 = vld [vmem:[#allocation11 + $0x70] sm:$0x3f]
    %vm620 = vcmask 310272
    %v622 = vsel %vm620, %v604, 0
    %vm624 = vcmask 1045504
    %v626 = vsel %vm624, %v617, 0
    %v629 = vsel %vm624, %v618, 0
    %v632 = vsel %vm624, %v619, 0
    %634 = vmatprep.subr.mxu0 %v606
    %635 = vmatpush1.msra.mxu0 %v605
    %636 = vmatprep.subr.mxu0 %v609
    %637 = vmatpush1.msra.mxu0 %v608
    %638 = vmatprep.subr.mxu0 %v612
    %639 = vmatpush1.msra.mxu0 %v611
    %640 = vmatprep.subr.mxu0 %v615
    %641 = vmatpush1.msra.mxu0 %v614
    %642 = vmatprep.subr.mxu0 %v629
    %643 = vmatpush1.msra.mxu0 %v626
    %644 = vmatprep.subr.mxu0 0.0
    %645 = vmatpush1.msra.mxu0 0.0
    %646 = vmatprep.subr.mxu0 0.0
    %647 = vmatpush1.msra.mxu0 0.0
    %648 = vmatprep.subr.mxu0 0.0
    %649 = vmatpush1.msra.mxu0 0.0
    %650 = vmatprep.subr.mxu0 0.0
    %651 = vmatpush1.msra.mxu0 0.0
    %652 = vmatprep.subr.mxu0 0.0
    %653 = vmatpush1.msra.mxu0 0.0
    %654 = vmatprep.subr.mxu0 0.0
    %655 = vmatpush1.msra.mxu0 0.0
    %656 = vmatprep.subr.mxu0 0.0
    %657 = vmatpush1.msra.mxu0 0.0
    %658 = vmatprep.subr.mxu0 0.0
    %659 = vmatpush1.msra.mxu0 0.0
    %660 = vmatprep.subr.mxu0 0.0
    %661 = vmatpush1.msra.mxu0 0.0
    %662 = vmatprep.subr.mxu0 0.0
    %663 = vmatpush1.msra.mxu0 0.0
    %664 = vmatprep.subr.mxu0 0.0
    %665 = vmatpush1.msra.mxu0 0.0
    %666 = vmatprep.subr.mxu0 0.0
    %667 = vmatpush1.msra.mxu0 0.0
    %668 = vmatprep.subr.mxu0 0.0
    %669 = vmatpush1.msra.mxu0 0.0
    %670 = vmatprep.subr.mxu0 0.0
    %671 = vmatpush1.msra.mxu0 0.0
    %672 = vmatprep.subr.mxu0 0.0
    %673 = vmatpush1.msra.mxu0 0.0
    %674 = vmatprep.subr.mxu0 0.0
    %675 = vmatpush1.msra.mxu0 0.0
    %676 = vmatprep.subr.mxu0 0.0
    %677 = vmatpush1.msra.mxu0 0.0
    %678 = vmatprep.subr.mxu0 0.0
    %679 = vmatpush1.msra.mxu0 0.0
    %680 = vmatprep.subr.mxu0 0.0
    %681 = vmatpush1.msra.mxu0 0.0
    %682 = vmatprep.subr.mxu0 0.0
    %683 = vmatpush1.msra.mxu0 0.0
    %684 = vmatprep.subr.mxu0 0.0
    %685 = vmatpush1.msra.mxu0 0.0
    %686 = vmatprep.subr.mxu0 0.0
    %687 = vmatpush1.msra.mxu0 0.0
    %688 = vmatprep.subr.mxu0 0.0
    %689 = vmatpush1.msra.mxu0 0.0
    %690 = vmatprep.subr.mxu0 0.0
    %691 = vmatpush1.msra.mxu0 0.0
    %692 = vmatprep.subr.mxu0 0.0
    %693 = vmatpush1.msra.mxu0 0.0
    %694 = vmatprep.subr.mxu0 0.0
    %695 = vmatpush1.msra.mxu0 0.0
    %696 = vmatprep.subr.mxu0 0.0
    %697 = vmatpush1.msra.mxu0 0.0
    %698 = vmatprep.mubr.f32.mxu0 0.0
    %699 = vmatmul.mubr.f32.gmra.mrb[0].mxu0 %v622
    %v700 = vpop.f32.mrb[0].mxu0
    %v701 = vadd.f32 0.0, %v700
    %v702 = vpop.f32.mrb[0].mxu0
    %v703 = vadd.f32 0.0, %v702
    %704 = vdwg.mxu0
    %705 = vmatprep.subr.mxu0 0.0
    %706 = vmatpush1.msra.mxu0 %v607
    %707 = vmatprep.subr.mxu0 0.0
    %708 = vmatpush1.msra.mxu0 %v610
    %709 = vmatprep.subr.mxu0 0.0
    %710 = vmatpush1.msra.mxu0 %v613
    %711 = vmatprep.subr.mxu0 0.0
    %712 = vmatpush1.msra.mxu0 %v616
    %713 = vmatprep.subr.mxu0 0.0
    %714 = vmatpush1.msra.mxu0 %v632
    %715 = vmatprep.subr.mxu0 0.0
    %716 = vmatpush1.msra.mxu0 0.0
    %717 = vmatprep.subr.mxu0 0.0
    %718 = vmatpush1.msra.mxu0 0.0
    %719 = vmatprep.subr.mxu0 0.0
    %720 = vmatpush1.msra.mxu0 0.0
    %721 = vmatprep.subr.mxu0 0.0
    %722 = vmatpush1.msra.mxu0 0.0
    %723 = vmatprep.subr.mxu0 0.0
    %724 = vmatpush1.msra.mxu0 0.0
    %725 = vmatprep.subr.mxu0 0.0
    %726 = vmatpush1.msra.mxu0 0.0
    %727 = vmatprep.subr.mxu0 0.0
    %728 = vmatpush1.msra.mxu0 0.0
    %729 = vmatprep.subr.mxu0 0.0
    %730 = vmatpush1.msra.mxu0 0.0
    %731 = vmatprep.subr.mxu0 0.0
    %732 = vmatpush1.msra.mxu0 0.0
    %733 = vmatprep.subr.mxu0 0.0
    %734 = vmatpush1.msra.mxu0 0.0
    %735 = vmatprep.subr.mxu0 0.0
    %736 = vmatpush1.msra.mxu0 0.0
    %737 = vmatprep.subr.mxu0 0.0
    %738 = vmatpush1.msra.mxu0 0.0
    %739 = vmatprep.subr.mxu0 0.0
    %740 = vmatpush1.msra.mxu0 0.0
    %741 = vmatprep.subr.mxu0 0.0
    %742 = vmatpush1.msra.mxu0 0.0
    %743 = vmatprep.subr.mxu0 0.0
    %744 = vmatpush1.msra.mxu0 0.0
    %745 = vmatprep.subr.mxu0 0.0
    %746 = vmatpush1.msra.mxu0 0.0
    %747 = vmatprep.subr.mxu0 0.0
    %748 = vmatpush1.msra.mxu0 0.0
    %749 = vmatprep.subr.mxu0 0.0
    %750 = vmatpush1.msra.mxu0 0.0
    %751 = vmatprep.subr.mxu0 0.0
    %752 = vmatpush1.msra.mxu0 0.0
    %753 = vmatprep.subr.mxu0 0.0
    %754 = vmatpush1.msra.mxu0 0.0
    %755 = vmatprep.subr.mxu0 0.0
    %756 = vmatpush1.msra.mxu0 0.0
    %757 = vmatprep.subr.mxu0 0.0
    %758 = vmatpush1.msra.mxu0 0.0
    %759 = vmatprep.subr.mxu0 0.0
    %760 = vmatpush1.msra.mxu0 0.0
    %761 = vmatprep.subr.mxu0 0.0
    %762 = vmatpush1.msra.mxu0 0.0
    %763 = vmatprep.subr.mxu0 0.0
    %764 = vmatpush1.msra.mxu0 0.0
    %765 = vmatprep.subr.mxu0 0.0
    %766 = vmatpush1.msra.mxu0 0.0
    %767 = vmatprep.subr.mxu0 0.0
    %768 = vmatpush1.msra.mxu0 0.0
    %769 = vmatprep.mubr.f32.mxu0 0.0
    %770 = vmatmul.mubr.f32.gmra.mrb[0].mxu0 %v622
    %v771 = vpop.f32.mrb[0].mxu0
    %v772 = vadd.f32 0.0, %v771
    %v773 = vpop.f32.mrb[0].mxu0
    %774 = vdwg.mxu0
    %v777 = vunpack.c.l.s4 1966171168
    %v778 = vunpack.c.0.s8 %v777
    %v779 = vlaneseq
    %v780 = vshrl.u32 %v779, 7
    %v781 = vsub.s32 %v778, %v780
    %v782 = vrot.slane %v268, %v781
    %v783 = vcombine.high %v782, %v782
    %v785 = vunpack.c.l.s4 1966171168
    %v786 = vunpack.c.0.s8 %v785
    %v787 = vlaneseq
    %v788 = vshrl.u32 %v787, 7
    %v789 = vsub.s32 %v786, %v788
    %v790 = vrot.slane %v782, %v789
    %v792 = vunpack.c.l.s4 1966171168
    %v793 = vunpack.c.0.s8 %v792
    %v794 = vlaneseq
    %v795 = vshrl.u32 %v794, 7
    %v796 = vsub.s32 %v793, %v795
    %v797 = vrot.slane %v783, %v796
    %v798 = vlaneseq
    %v799 = vshrl.u32 %v798, 7
    %v800 = vsub.s32 0, %v799
    %v801 = vrot.slane %v790, %v800
    %v802 = vlaneseq
    %v803 = vshrl.u32 %v802, 7
    %v804 = vsub.s32 0, %v803
    %v805 = vrot.slane %v797, %v804
    %v808 = vadd.f32 %v517, %v801
    %v809 = vadd.f32 %v523, %v805
    %v810 = vtanh.pop %v808
    %v811 = vtanh.pop %v809
    %v812 = vld [vmem:[%s6] sm:$0x1]
    %v814 = vlaneseq
    %v815 = vshrl.u32 %v814, 7
    %v816 = vsub.s32 0, %v815
    %v817 = vrot.slane %v812, %v816
    %v819 = vmul.f32 %v810, %v817
    %v820 = vmul.f32 %v811, %v817
    %821 = vadd.xlane.f32.xlu0 %v819
    %v822 = vpop.xlane.xlu0 %821
    %823 = vadd.xlane.f32.xlu0 %v820
    %v824 = vpop.xlane.xlu0 %823
    %v827 = vlaneseq
    %v828 = vand.u32 %v827, 127
    %v829 = vlaneseq
    %v830 = vshrl.u32 %v829, 7
    %v831 = vsub.s32 %v828, %v830
    %v832 = vrot.slane %v822, %v831
    %v833 = vlaneseq
    %v834 = vshrl.u32 %v833, 7
    %v835 = vsub.s32 %v828, %v834
    %v836 = vrot.slane %v824, %v835
    %vm837 = vcmask 1041409
    %v838 = vsel %vm837, %v836, %v832
    %vm840 = vcmask 58368
    %v841 = vsel %vm840, %v838, -inf
    %842 = vmax.xlane.f32.xlu0 %v841
    %v843 = vpop.xlane.xlu0 %842
    %v845 = vlaneseq
    %v846 = vshrl.u32 %v845, 7
    %v847 = vsub.s32 0, %v846
    %v848 = vrot.slane %v843, %v847
    %v849 = vlaneseq
    %v850 = vshrl.u32 %v849, 7
    %v851 = vsub.s32 1, %v850
    %v852 = vrot.slane %v843, %v851
    %v855 = vsub.f32 %v822, %v848
    %v856 = vsub.f32 %v824, %v852
    %v857 = vmul.f32 %v855, 1.442695
    %v858 = vpow.pop %v857
    %v859 = vmul.f32 %v856, 1.442695
    %v860 = vpow.pop %v859
    %863 = vset.pattern.permute.xlu0 0
    %864 = vperm.xlu0 %863, %v858
    %v865 = vpop.permute.xlu0 %864
    %866 = vset.pattern.permute.xlu0 0
    %867 = vperm.xlu0 %866, %v860
    %v868 = vpop.permute.xlu0 %867
    %v869 = vlaneseq
    %v870 = vshrl.u32 %v869, 7
    %v871 = vsub.s32 %v828, %v870
    %v872 = vrot.slane %v865, %v871
    %v873 = vlaneseq
    %v874 = vshrl.u32 %v873, 7
    %v875 = vsub.s32 %v828, %v874
    %v876 = vrot.slane %v868, %v875
    %v877 = vsel %vm837, %v876, %v872
    %v879 = vsel %vm840, %v877, 0.0
    %880 = vadd.xlane.f32.xlu0 %v879
    %v881 = vpop.xlane.xlu0 %880
    %v883 = vlaneseq
    %v884 = vshrl.u32 %v883, 7
    %v885 = vsub.s32 0, %v884
    %v886 = vrot.slane %v881, %v885
    %v887 = vlaneseq
    %v888 = vshrl.u32 %v887, 7
    %v889 = vsub.s32 1, %v888
    %v890 = vrot.slane %v881, %v889
    %v893 = vrcp.pop %v886
    %v894 = vmul.f32 %v858, %v893
    %v895 = vrcp.pop %v890
    %v896 = vmul.f32 %v860, %v895
    %899 = vset.pattern.permute.xlu0 0
    %900 = vperm.xlu0 %899, %v894
    %v901 = vpop.permute.xlu0 %900
    %902 = vset.pattern.permute.xlu0 0
    %903 = vperm.xlu0 %902, %v896
    %v904 = vpop.permute.xlu0 %903
    %v905 = vlaneseq
    %v906 = vshrl.u32 %v905, 7
    %v907 = vsub.s32 %v828, %v906
    %v908 = vrot.slane %v901, %v907
    %v909 = vlaneseq
    %v910 = vshrl.u32 %v909, 7
    %v911 = vsub.s32 %v828, %v910
    %v912 = vrot.slane %v904, %v911
    %v913 = vsel %vm837, %v912, %v908
    %915 = vst.msk [vmem:[#allocation14] sm:$0x3] %vm840, %v913
    %v918 = vmul.f32 %v901, %v519
    %v919 = vmul.f32 %v901, %v594
    %v920 = vmul.f32 %v901, %v596
    %v921 = vmul.f32 %v904, %v525
    %v922 = vmul.f32 %v904, %v600
    %v923 = vmul.f32 %v904, %v602
    %v924 = vrot.slane %v918, 4
    %v925 = vadd.f32 %v918, %v924
    %v926 = vrot.slane %v925, 2
    %v927 = vadd.f32 %v925, %v926
    %v928 = vrot.slane %v927, 1
    %v929 = vadd.f32 %v927, %v928
    %v930 = vrot.slane %v919, 4
    %v931 = vadd.f32 %v919, %v930
    %v932 = vrot.slane %v931, 2
    %v933 = vadd.f32 %v931, %v932
    %v934 = vrot.slane %v933, 1
    %v935 = vadd.f32 %v933, %v934
    %v936 = vrot.slane %v920, 4
    %v937 = vadd.f32 %v920, %v936
    %v938 = vrot.slane %v937, 2
    %v939 = vadd.f32 %v937, %v938
    %v940 = vrot.slane %v939, 1
    %v941 = vadd.f32 %v939, %v940
    %v942 = vrot.slane %v921, 4
    %v943 = vadd.f32 %v921, %v942
    %v944 = vrot.slane %v943, 2
    %v945 = vadd.f32 %v943, %v944
    %v946 = vrot.slane %v945, 1
    %v947 = vadd.f32 %v945, %v946
    %v948 = vrot.slane %v922, 4
    %v949 = vadd.f32 %v922, %v948
    %v950 = vrot.slane %v949, 2
    %v951 = vadd.f32 %v949, %v950
    %v952 = vrot.slane %v951, 1
    %v953 = vadd.f32 %v951, %v952
    %v954 = vrot.slane %v923, 4
    %v955 = vadd.f32 %v923, %v954
    %v956 = vrot.slane %v955, 2
    %v957 = vadd.f32 %v955, %v956
    %v958 = vrot.slane %v957, 1
    %v959 = vadd.f32 %v957, %v958
    %v963 = vrot.slane %v701, 1
    %v964 = vrot.slane %v703, 1
    %v965 = vrot.slane %v772, 1
    %v972 = vadd.f32 %v929, %v701
    %v973 = vadd.f32 %v935, %v703
    %v974 = vadd.f32 %v941, %v772
    %v975 = vadd.f32 %v947, %v963
    %v976 = vadd.f32 %v953, %v964
    %v977 = vadd.f32 %v959, %v965
    %v978 = vld [vmem:[%s8] sm:$0x7]
    %v980 = vlaneseq
    %v981 = vshrl.u32 %v980, 7
    %v982 = vsub.s32 0, %v981
    %v983 = vrot.slane %v978, %v982
    %v984 = vlaneseq
    %v985 = vshrl.u32 %v984, 7
    %v986 = vsub.s32 1, %v985
    %v987 = vrot.slane %v978, %v986
    %v988 = vlaneseq
    %v989 = vshrl.u32 %v988, 7
    %v990 = vsub.s32 2, %v989
    %v991 = vrot.slane %v978, %v990
    %v995 = vadd.f32 %v972, %v983
    %v996 = vadd.f32 %v973, %v987
    %v997 = vadd.f32 %v974, %v991
    %v998 = vadd.f32 %v975, %v983
    %v999 = vadd.f32 %v976, %v987
    %v1000 = vadd.f32 %v977, %v991
    %v1002 = vrot.slane %v270, 1
    %v1005 = vadd.f32 %v995, %v270
    %v1006 = vadd.f32 %v998, %v1002
    %v1007 = vxor.u32 %v1005, 2147483648
    %v1008 = vxor.u32 %v1006, 2147483648
    %v1009 = vmul.f32 %v1007, 1.442695
    %v1010 = vpow.pop %v1009
    %v1011 = vmul.f32 %v1008, 1.442695
    %v1012 = vpow.pop %v1011
    %v1013 = vadd.f32 %v1010, 1.0
    %v1014 = vadd.f32 %v1012, 1.0
    %v1015 = vrcp.pop %v1013
    %v1016 = vmul.f32 1.0, %v1015
    %v1017 = vrcp.pop %v1014
    %v1018 = vmul.f32 1.0, %v1017
    %v1020 = vrot.slane %v339, 1
    %v1023 = vadd.f32 %v996, %v339
    %v1024 = vadd.f32 %v999, %v1020
    %v1025 = vxor.u32 %v1023, 2147483648
    %v1026 = vxor.u32 %v1024, 2147483648
    %v1027 = vmul.f32 %v1025, 1.442695
    %v1028 = vpow.pop %v1027
    %v1029 = vmul.f32 %v1026, 1.442695
    %v1030 = vpow.pop %v1029
    %v1031 = vadd.f32 %v1028, 1.0
    %v1032 = vadd.f32 %v1030, 1.0
    %v1033 = vrcp.pop %v1031
    %v1034 = vmul.f32 1.0, %v1033
    %v1035 = vrcp.pop %v1032
    %v1036 = vmul.f32 1.0, %v1035
    %v1038 = vrot.slane %v341, 1
    %v1041 = vmul.f32 %v1016, %v341
    %v1042 = vmul.f32 %v1018, %v1038
    %v1043 = vadd.f32 %v997, %v1041
    %v1044 = vadd.f32 %v1000, %v1042
    %v1045 = vtanh.pop %v1043
    %v1046 = vtanh.pop %v1044
    %v1047 = vsub.f32 1.0, %v1034
    %v1048 = vsub.f32 1.0, %v1036
    %v1049 = vmul.f32 %v1047, %v1045
    %v1050 = vmul.f32 %v1048, %v1046
    %v1052 = vrot.slane %v114, 1
    %v1055 = vmul.f32 %v1034, %v114
    %v1056 = vmul.f32 %v1036, %v1052
    %v1057 = vadd.f32 %v1049, %v1055
    %v1058 = vadd.f32 %v1050, %v1056
    %v1061 = vrot.slane %v1058, 7
    %v1062 = vsel %vm837, %v1061, %v1057
    %1064 = vst [vmem:[#allocation13] sm:$0x3] %v1062
    // Predicated region
    $region62: #{tpu_custom_call.1} parent=1 // pred_check
      _
    $region63: #{tpu_custom_call.1} parent=1 // pred_check_branch
      %1066 = sbr.rel (0) target = $region65
    $region64: #{tpu_custom_call.1} parent=1 // pred_region
      %s1068 = ssub.s32 32, 32
      %1069 = vsyncadd [#allocation4], %s1068
      %s1071 = sshll.u32 [#allocation13], 4
      %s1072 = int_to_ptr.vmem [resolvable:$true] %s1071
      %1074 = dma.vmem_to_hbm [thread:$0]  %s1072, 32, %s9, [#allocation4]
    $region65: #{tpu_custom_call.1} parent=1 // pred_fallthru
      _
    // Predicated region
    $region66: #{tpu_custom_call.1} parent=1 // pred_check
      _
    $region67: #{tpu_custom_call.1} parent=1 // pred_check_branch
      %1076 = sbr.rel (0) target = $region69
    $region68: #{tpu_custom_call.1} parent=1 // pred_region
      %s1078 = ssub.s32 32, 32
      %1079 = vsyncadd [#allocation15], %s1078
      %s1081 = sshll.u32 [#allocation14], 4
      %s1082 = int_to_ptr.vmem [resolvable:$true] %s1081
      %1084 = dma.vmem_to_hbm [thread:$0]  %s1082, 32, %s10, [#allocation15]
    $region69: #{tpu_custom_call.1} parent=1 // pred_fallthru
      _
    // Predicated region
    $region70: #{tpu_custom_call.1} parent=1 // pred_check
      _
    $region71: #{tpu_custom_call.1} parent=1 // pred_check_branch
      %1086 = sbr.rel (0) target = $region73
    $region72: #{tpu_custom_call.1} parent=1 // pred_region
      %1087 = dma.done [#allocation4], 32
    $region73: #{tpu_custom_call.1} parent=1 // pred_fallthru
      _
    // Predicated region
    $region74: #{tpu_custom_call.1} parent=1 // pred_check
      _
    $region75: #{tpu_custom_call.1} parent=1 // pred_check_branch
      %1089 = sbr.rel (0) target = $region77
    $region76: #{tpu_custom_call.1} parent=1 // pred_region
      %1090 = dma.done [#allocation15], 32
    $region77: #{tpu_custom_call.1} parent=1 // pred_fallthru
      _
    %1091 = vsyncpa [#allocation3], 1
    %1092 = vsyncpa [#allocation6], 1
    %1093 = vsyncpa [#allocation9], 1
    %1094 = vsyncpa [#allocation12], 1
    %1095 = vsyncpa [#allocation4], 1
    %1096 = vsyncpa [#allocation15], 1

</llo_original>
